<compile_context>
chip_gen: v5e
topology: v5e:2x2
jax: 0.10.0
libtpu: 0.0.40
codegen_flags: <defaults>
</compile_context>

<pallas_src>
import jax
import jax.numpy as jnp
from jax.experimental import pallas as pl
from jax.experimental.pallas import tpu as pltpu


def _round_up(x, m):
    return (x + m - 1) // m * m


def classblock_kernel(x_ref, w1_ref, b1_ref, w2_ref, b2_ref, out_ref):
    # Bottleneck linear with BatchNorm1d (eval) pre-folded into W1 / bias:
    #   h = x @ W1_eff + b_eff
    h = jnp.dot(x_ref[...], w1_ref[...], preferred_element_type=jnp.float32)
    h = h + b1_ref[...]
    # LeakyReLU omitted (relu=False default); Dropout in eval mode == identity.
    # Classifier linear: y = h @ W2^T + b2 (feed the MXU in the compute dtype,
    # accumulate in f32).
    y = jnp.dot(h.astype(w2_ref.dtype), w2_ref[...],
                preferred_element_type=jnp.float32)
    out_ref[...] = (y + b2_ref[...]).astype(out_ref.dtype)


def prepare_classblock_params(w1, b1, bn_gamma, bn_beta, bn_mean, bn_var, w2, b2,
                              *, eps=1e-5, compute_dtype=jnp.float32):
    """One-time fold / transpose / pad of the module parameters.

    Do this at load time (or under jit so it constant-folds) — NOT on the
    per-forward path — so the pallas_call is the only HBM consumer per call.

    w1: [Bn, D_in] (torch layout), w2: [C, Bn] (torch layout).
    Returns (w1_eff, b1_eff, w2_t, b2_p) ready for classblock_forward.
    """
    Bn, _ = w1.shape
    C = w2.shape[0]

    # Fold BN running stats (eval mode) into a per-feature scale/shift, then
    # fold the scale into W1's output columns and merge everything into one bias.
    inv_std = 1.0 / jnp.sqrt(bn_var + eps)
    scale = bn_gamma * inv_std                     # [Bn]
    shift = bn_beta - bn_mean * scale              # [Bn]
    w1_eff = (w1 * scale[:, None]).T               # [D_in, Bn]
    b1_eff = b1 * scale + shift                    # [Bn]
    w2_t = w2.T                                    # [Bn, C]

    # Zero-pad feature dims to multiples of 128: lane-dense stores, unmasked
    # MXU columns.  Zero padding keeps the math exact (padded h columns are 0,
    # padded W2 rows are 0, padded output columns are sliced off).
    bn_p = _round_up(Bn, 128)
    c_p = _round_up(C, 128)
    w1_eff = jnp.pad(w1_eff, ((0, 0), (0, bn_p - Bn)))
    b1_eff = jnp.pad(b1_eff, (0, bn_p - Bn))
    w2_t = jnp.pad(w2_t, ((0, bn_p - Bn), (0, c_p - C)))
    b2_p = jnp.pad(b2, (0, c_p - C))

    return (w1_eff.astype(compute_dtype),                      # [D_in, Bn_p]
            b1_eff.reshape(1, bn_p).astype(jnp.float32),       # [1, Bn_p]
            w2_t.astype(compute_dtype),                        # [Bn_p, C_p]
            b2_p.reshape(1, c_p).astype(jnp.float32))          # [1, C_p]


def classblock_forward(x, params, class_num, *, block_b=256):
    """x: [B, D_in] float32; params from prepare_classblock_params."""
    w1, b1, w2, b2 = params
    B, D_in = x.shape
    bn_p = w1.shape[1]
    c_p = w2.shape[1]
    compute_dtype = w1.dtype

    # Batch tile: multiple of the sublane pack (8 for f32, 16 for bf16), capped
    # so the [bm, Bn_p] f32 intermediate stays modest (no vreg thrash) and the
    # double-buffered x/out tiles fit comfortably in scoped VMEM on v7x (64 MiB).
    sub = 16 if compute_dtype == jnp.bfloat16 else 8
    bm = _round_up(min(block_b, _round_up(B, sub)), sub)
    b_pad = _round_up(B, bm)

    x_in = x.astype(compute_dtype)
    if b_pad != B:
        x_in = jnp.pad(x_in, ((0, b_pad - B), (0, 0)))

    out = pl.pallas_call(
        classblock_kernel,
        out_shape=jax.ShapeDtypeStruct((b_pad, c_p), jnp.float32),
        grid=(b_pad // bm,),
        in_specs=[
            pl.BlockSpec((bm, D_in), lambda i: (i, 0)),    # x tile: pipelined
            pl.BlockSpec((D_in, bn_p), lambda i: (0, 0)),  # W1: resident in VMEM
            pl.BlockSpec((1, bn_p), lambda i: (0, 0)),     # merged bias
            pl.BlockSpec((bn_p, c_p), lambda i: (0, 0)),   # W2: resident in VMEM
            pl.BlockSpec((1, c_p), lambda i: (0, 0)),      # classifier bias
        ],
        out_specs=pl.BlockSpec((bm, c_p), lambda i: (i, 0)),
        compiler_params=pltpu.CompilerParams(
            dimension_semantics=("parallel",)),
    )(x_in, w1, b1, w2, b2)

    return out[:B, :class_num]


def init_params(key, input_dim, num_bottleneck, class_num):
    k1, k2, k3 = jax.random.split(key, 3)
    # add_block Linear: kaiming_normal_(fan_out, a=0) -> std = sqrt(2 / fan_out)
    std1 = (2.0 / num_bottleneck) ** 0.5
    w1 = std1 * jax.random.normal(k1, (num_bottleneck, input_dim), jnp.float32)
    b1 = jnp.zeros((num_bottleneck,), jnp.float32)
    # BatchNorm1d: weight ~ N(1, 0.02), bias = 0, running stats mean=0 var=1
    bn_gamma = 1.0 + 0.02 * jax.random.normal(k2, (num_bottleneck,), jnp.float32)
    bn_beta = jnp.zeros((num_bottleneck,), jnp.float32)
    bn_mean = jnp.zeros((num_bottleneck,), jnp.float32)
    bn_var = jnp.ones((num_bottleneck,), jnp.float32)
    # classifier Linear: weight ~ N(0, 0.001), bias = 0
    w2 = 0.001 * jax.random.normal(k3, (class_num, num_bottleneck), jnp.float32)
    b2 = jnp.zeros((class_num,), jnp.float32)
    return w1, b1, bn_gamma, bn_beta, bn_mean, bn_var, w2, b2


if __name__ == "__main__":
    key = jax.random.PRNGKey(0)
    B, input_dim, num_bottleneck, class_num = 32, 32, 64, 16

    kx, kp = jax.random.split(key)
    x = jax.random.normal(kx, (B, input_dim), jnp.float32)
    raw = init_params(kp, input_dim, num_bottleneck, class_num)

    # Pure-JAX eval-mode reference (same math as the PyTorch module in .eval()).
    w1, b1, g, bta, mu, var, w2, b2 = raw
    h = x @ w1.T + b1
    h = (h - mu) / jnp.sqrt(var + 1e-5) * g + bta
    ref = h @ w2.T + b2

    # f32-operand path; small block_b so the batch grid actually tiles (grid=(4,)).
    p32 = prepare_classblock_params(*raw, compute_dtype=jnp.float32)
    out32 = jax.block_until_ready(classblock_forward(x, p32, class_num, block_b=8))
    assert out32.shape == (B, class_num)
    assert jnp.allclose(out32, ref, atol=1e-4, rtol=1e-4)

    # bf16-operand path (MXU-friendly on v6e/v7x), f32 accumulation; looser check.
    pbf = prepare_classblock_params(*raw, compute_dtype=jnp.bfloat16)
    outbf = jax.block_until_ready(classblock_forward(x, pbf, class_num, block_b=16))
    assert outbf.shape == (B, class_num)
    assert jnp.allclose(outbf, ref, atol=3e-3, rtol=3e-2)

    print("KERNEL_OK")
</pallas_src>

<mosaic_0001>
module attributes {stable_mosaic.version = 11 : i64} {
  func.func @classblock_kernel(%arg0: i32, %arg1: memref<8x32xf32, #tpu.memory_space<vmem>>, %arg2: memref<32x128xf32, #tpu.memory_space<vmem>>, %arg3: memref<1x128xf32, #tpu.memory_space<vmem>>, %arg4: memref<128x128xf32, #tpu.memory_space<vmem>>, %arg5: memref<1x128xf32, #tpu.memory_space<vmem>>, %arg6: memref<8x128xf32, #tpu.memory_space<vmem>>) attributes {dimension_semantics = [#tpu.dimension_semantics<parallel>], iteration_bounds = array<i64: 4>, scalar_prefetch = 0 : i64, scratch_operands = 0 : i64, tpu.core_type = #tpu.core_type<tc>, window_params = [{transform_indices = @transform_0, window_bounds = array<i64: 8, 32>}, {pipeline_mode = #tpu.pipeline_mode<synchronous>, transform_indices = @transform_1, window_bounds = array<i64: 32, 128>}, {pipeline_mode = #tpu.pipeline_mode<synchronous>, transform_indices = @transform_2, window_bounds = array<i64: 1, 128>}, {pipeline_mode = #tpu.pipeline_mode<synchronous>, transform_indices = @transform_3, window_bounds = array<i64: 128, 128>}, {pipeline_mode = #tpu.pipeline_mode<synchronous>, transform_indices = @transform_4, window_bounds = array<i64: 1, 128>}, {transform_indices = @transform_5, window_bounds = array<i64: 8, 128>}]} {
    %c0 = arith.constant 0 : index
    %c0_0 = arith.constant 0 : index
    %0 = vector.load %arg1[%c0, %c0_0] : memref<8x32xf32, #tpu.memory_space<vmem>>, vector<8x32xf32>
    %c0_1 = arith.constant 0 : index
    %c0_2 = arith.constant 0 : index
    %1 = vector.load %arg2[%c0_1, %c0_2] : memref<32x128xf32, #tpu.memory_space<vmem>>, vector<32x128xf32>
    %cst = arith.constant dense<0.000000e+00> : vector<8x128xf32>
    %2 = tpu.matmul %0, %1, %cst {dimension_numbers = #tpu.dot_dimension_numbers<[1], [0], [0], [1], [0, 0, 1, 1], [], []>} : vector<8x32xf32>, vector<32x128xf32>, vector<8x128xf32> -> vector<8x128xf32>
    %c0_3 = arith.constant 0 : index
    %c0_4 = arith.constant 0 : index
    %3 = vector.load %arg3[%c0_3, %c0_4] : memref<1x128xf32, #tpu.memory_space<vmem>>, vector<1x128xf32>
    %4 = vector.broadcast %3 : vector<1x128xf32> to vector<8x128xf32>
    %5 = arith.addf %2, %4 : vector<8x128xf32>
    %c0_5 = arith.constant 0 : index
    %c0_6 = arith.constant 0 : index
    %6 = vector.load %arg4[%c0_5, %c0_6] : memref<128x128xf32, #tpu.memory_space<vmem>>, vector<128x128xf32>
    %cst_7 = arith.constant dense<0.000000e+00> : vector<8x128xf32>
    %7 = tpu.matmul %5, %6, %cst_7 {dimension_numbers = #tpu.dot_dimension_numbers<[1], [0], [0], [1], [0, 0, 1, 1], [], []>} : vector<8x128xf32>, vector<128x128xf32>, vector<8x128xf32> -> vector<8x128xf32>
    %c0_8 = arith.constant 0 : index
    %c0_9 = arith.constant 0 : index
    %8 = vector.load %arg5[%c0_8, %c0_9] : memref<1x128xf32, #tpu.memory_space<vmem>>, vector<1x128xf32>
    %9 = vector.broadcast %8 : vector<1x128xf32> to vector<8x128xf32>
    %10 = arith.addf %7, %9 : vector<8x128xf32>
    %c0_10 = arith.constant 0 : index
    %c0_11 = arith.constant 0 : index
    %11 = vector.load %arg6[%c0_10, %c0_11] : memref<8x128xf32, #tpu.memory_space<vmem>>, vector<8x128xf32>
    tpu.vector_store %arg6[%c0_10, %c0_11], %10 {strides = array<i32>} : memref<8x128xf32, #tpu.memory_space<vmem>>, vector<8x128xf32>,
    return
  }
  func.func @transform_0(%arg0: i32) -> (i32, i32) {
    %c0_i32 = arith.constant 0 : i32
    %c0_i32_0 = arith.constant 0 : i32
    return %arg0, %c0_i32 : i32, i32
  }
  func.func @transform_1(%arg0: i32) -> (i32, i32) {
    %c0_i32 = arith.constant 0 : i32
    %c0_i32_0 = arith.constant 0 : i32
    %c0_i32_1 = arith.constant 0 : i32
    return %c0_i32, %c0_i32_0 : i32, i32
  }
  func.func @transform_2(%arg0: i32) -> (i32, i32) {
    %c0_i32 = arith.constant 0 : i32
    %c0_i32_0 = arith.constant 0 : i32
    %c0_i32_1 = arith.constant 0 : i32
    return %c0_i32, %c0_i32_0 : i32, i32
  }
  func.func @transform_3(%arg0: i32) -> (i32, i32) {
    %c0_i32 = arith.constant 0 : i32
    %c0_i32_0 = arith.constant 0 : i32
    %c0_i32_1 = arith.constant 0 : i32
    return %c0_i32, %c0_i32_0 : i32, i32
  }
  func.func @transform_4(%arg0: i32) -> (i32, i32) {
    %c0_i32 = arith.constant 0 : i32
    %c0_i32_0 = arith.constant 0 : i32
    %c0_i32_1 = arith.constant 0 : i32
    return %c0_i32, %c0_i32_0 : i32, i32
  }
  func.func @transform_5(%arg0: i32) -> (i32, i32) {
    %c0_i32 = arith.constant 0 : i32
    %c0_i32_0 = arith.constant 0 : i32
    return %arg0, %c0_i32 : i32, i32
  }
}

</mosaic_0001>

<llo_original>
// kernel: tpu_custom_call.1
$region0: #{tpu_custom_call.1}
  #allocation0 [shape = 'u32[]', space=smem, size = 0x4, offset = 0x4, fixed_abs, tag = 'smem constant byte address 0x4 - core index']
  #allocation1 [shape = 'u32[72,128]{1,0:T(1,128)}', space=vmem, size = 0x9000, scoped, tag = 'internal scratch']
  %s0 = inlined_call_operand.hbm [shape: f32[32,32], index: 0, kind: input, shape index: {}]
  %s1 = inlined_call_operand.hbm [shape: f32[32,128], index: 1, kind: input, shape index: {}]
  %s2 = inlined_call_operand.vmem [shape: f32[1,128], index: 2, kind: input, shape index: {}]
  %s3 = inlined_call_operand.hbm [shape: f32[128,128], index: 3, kind: input, shape index: {}]
  %s4 = inlined_call_operand.vmem [shape: f32[1,128], index: 4, kind: input, shape index: {}]
  %s5 = inlined_call_operand.hbm [shape: f32[32,128], index: 5, kind: output, shape index: {}]
  %s6 = sld [smem:[#allocation0]]
  $region65: #{tpu_custom_call.1} parent=0
    _
  %s8 = ssub.s32 1, %s6
  %s9 = scalar_select 0, %s8, %s6
  $region1: #{tpu_custom_call.1} parent=0
    #allocation2 [shape = 'u8[8192]{0}', space=vmem, size = 0x2000, scoped, tag = 'input window, operand 0']
    #allocation3 [shape = 's32[2]{0}', space=sflag, size = 0x8, scoped, tag = 'scoped memory for tpu_custom_call.1']
    #allocation4 [shape = 's32[2]{0}', space=sflag, size = 0x8, scoped, tag = 'scoped memory for tpu_custom_call.1']
    #allocation5 [shape = 'u8[16384]{0}', space=vmem, size = 0x4000, scoped, tag = 'input window, operand 1, single buffered']
    #allocation6 [shape = 's32[1]{0}', space=sflag, size = 0x4, scoped, tag = 'scoped memory for tpu_custom_call.1']
    #allocation7 [shape = 'u8[65536]{0}', space=vmem, size = 0x10000, scoped, tag = 'input window, operand 3, single buffered']
    #allocation8 [shape = 'u8[8192]{0}', space=vmem, size = 0x2000, scoped, tag = 'output window, operand 0']
    %10 = vsyncpa [#allocation3], 0
    %s11 = scalar_lea.sflag [#allocation3], 1
    %12 = vsyncpa %s11, 0
    %13 = vsyncpa [#allocation6], 0
    %14 = vsyncpa [#allocation4], 0
    %s15 = scalar_lea.sflag [#allocation4], 1
    %16 = vsyncpa %s15, 0
    loop: start=0, step=1, limit=6
    $region2: #{tpu_custom_call.1} parent=1 // loop_pre_header
      _
    $region3: #{tpu_custom_call.1} parent=1 // loop_header
      %s18 = sphi 0, %s22
      %p19 = scmp.ge.s32.totalorder %s18, 6
      %s28 = sphi 0, %s30
      %s31 = sphi 0, %s28
      %s32 = sphi 0, %s31
      %s48 = sphi 0, %s32
      %s52 = sphi 0, %s52
      %s54 = sphi 0, %s52
      %s55 = sphi 0, %s54
      %s69 = sphi 0, %s55
      %s73 = sphi 0, %s73
      %s75 = sphi 0, %s73
      %s76 = sphi 0, %s75
      %s90 = sphi 0, %s76
      %s94 = sphi 0, %s94
      %s96 = sphi 0, %s94
      %s97 = sphi 0, %s96
      %s111 = sphi 0, %s97
      %s115 = sphi 0, %s115
      %s117 = sphi 0, %s115
      %s118 = sphi 0, %s117
      %s132 = sphi 0, %s118
      %s138 = sphi 0, %s140
      %s141 = sphi 0, %s138
      %s142 = sphi 0, %s141
      %s158 = sphi 0, %s142
    $region4: #{tpu_custom_call.1} parent=1 // loop_header_branch
      %21 = sbr.rel (%p19) target = $region8
    $region5: #{tpu_custom_call.1} parent=1 // loop_body
      %s23 = ssub.s32 %s18, 1
      %s24 = ssub.s32 %s18, 2
      %s25 = sadd.s32 %s18, 1
      %s26 = ssub.s32 %s18, %s25
      %p27 = scmp.eq.s32.totalorder %s26, 0
      %s29 = sadd.s32 %s28, 1
      %s30 = scalar_select %p27, %s28, %s29
      %p33 = pneg %p27
      %p34 = scmp.eq.s32.totalorder %s18, 3
      %p35 = por %p33, %p34
      %p36 = scmp.ne.s32.totalorder %s28, %s31
      %p37 = scmp.eq.s32.totalorder %s18, 0
      %p38 = por %p36, %p37
      %p39 = scmp.ne.s32.totalorder %s28, %s31
      %p40 = scmp.eq.s32.totalorder %s23, 3
      %p41 = por %p39, %p40
      %p42 = scmp.ne.s32.totalorder %s31, %s32
      %p43 = scmp.eq.s32.totalorder %s23, 0
      %p44 = por %p42, %p43
      %p45 = scmp.ne.s32.totalorder %s31, %s32
      %p46 = scmp.eq.s32.totalorder %s24, 3
      %p47 = por %p45, %p46
      %p49 = scmp.ne.s32.totalorder %s32, %s48
      %p50 = scmp.eq.s32.totalorder %s24, 0
      %p51 = por %p49, %p50
      %s53 = sadd.s32 %s52, 1
      %p56 = scmp.eq.s32.totalorder %s18, 3
      %p57 = scmp.ne.s32.totalorder %s52, %s54
      %p58 = scmp.eq.s32.totalorder %s18, 0
      %p59 = por %p57, %p58
      %p60 = scmp.ne.s32.totalorder %s52, %s54
      %p61 = scmp.eq.s32.totalorder %s23, 3
      %p62 = por %p60, %p61
      %p63 = scmp.ne.s32.totalorder %s54, %s55
      %p64 = scmp.eq.s32.totalorder %s23, 0
      %p65 = por %p63, %p64
      %p66 = scmp.ne.s32.totalorder %s54, %s55
      %p67 = scmp.eq.s32.totalorder %s24, 3
      %p68 = por %p66, %p67
      %p70 = scmp.ne.s32.totalorder %s55, %s69
      %p71 = scmp.eq.s32.totalorder %s24, 0
      %p72 = por %p70, %p71
      %s74 = sadd.s32 %s73, 1
      %p77 = scmp.eq.s32.totalorder %s18, 3
      %p78 = scmp.ne.s32.totalorder %s73, %s75
      %p79 = scmp.eq.s32.totalorder %s18, 0
      %p80 = por %p78, %p79
      %p81 = scmp.ne.s32.totalorder %s73, %s75
      %p82 = scmp.eq.s32.totalorder %s23, 3
      %p83 = por %p81, %p82
      %p84 = scmp.ne.s32.totalorder %s75, %s76
      %p85 = scmp.eq.s32.totalorder %s23, 0
      %p86 = por %p84, %p85
      %p87 = scmp.ne.s32.totalorder %s75, %s76
      %p88 = scmp.eq.s32.totalorder %s24, 3
      %p89 = por %p87, %p88
      %p91 = scmp.ne.s32.totalorder %s76, %s90
      %p92 = scmp.eq.s32.totalorder %s24, 0
      %p93 = por %p91, %p92
      %s95 = sadd.s32 %s94, 1
      %p98 = scmp.eq.s32.totalorder %s18, 3
      %p99 = scmp.ne.s32.totalorder %s94, %s96
      %p100 = scmp.eq.s32.totalorder %s18, 0
      %p101 = por %p99, %p100
      %p102 = scmp.ne.s32.totalorder %s94, %s96
      %p103 = scmp.eq.s32.totalorder %s23, 3
      %p104 = por %p102, %p103
      %p105 = scmp.ne.s32.totalorder %s96, %s97
      %p106 = scmp.eq.s32.totalorder %s23, 0
      %p107 = por %p105, %p106
      %p108 = scmp.ne.s32.totalorder %s96, %s97
      %p109 = scmp.eq.s32.totalorder %s24, 3
      %p110 = por %p108, %p109
      %p112 = scmp.ne.s32.totalorder %s97, %s111
      %p113 = scmp.eq.s32.totalorder %s24, 0
      %p114 = por %p112, %p113
      %s116 = sadd.s32 %s115, 1
      %p119 = scmp.eq.s32.totalorder %s18, 3
      %p120 = scmp.ne.s32.totalorder %s115, %s117
      %p121 = scmp.eq.s32.totalorder %s18, 0
      %p122 = por %p120, %p121
      %p123 = scmp.ne.s32.totalorder %s115, %s117
      %p124 = scmp.eq.s32.totalorder %s23, 3
      %p125 = por %p123, %p124
      %p126 = scmp.ne.s32.totalorder %s117, %s118
      %p127 = scmp.eq.s32.totalorder %s23, 0
      %p128 = por %p126, %p127
      %p129 = scmp.ne.s32.totalorder %s117, %s118
      %p130 = scmp.eq.s32.totalorder %s24, 3
      %p131 = por %p129, %p130
      %p133 = scmp.ne.s32.totalorder %s118, %s132
      %p134 = scmp.eq.s32.totalorder %s24, 0
      %p135 = por %p133, %p134
      %s136 = ssub.s32 %s18, %s25
      %p137 = scmp.eq.s32.totalorder %s136, 0
      %s139 = sadd.s32 %s138, 1
      %s140 = scalar_select %p137, %s138, %s139
      %p143 = pneg %p137
      %p144 = scmp.eq.s32.totalorder %s18, 3
      %p145 = por %p143, %p144
      %p146 = scmp.ne.s32.totalorder %s138, %s141
      %p147 = scmp.eq.s32.totalorder %s18, 0
      %p148 = por %p146, %p147
      %p149 = scmp.ne.s32.totalorder %s138, %s141
      %p150 = scmp.eq.s32.totalorder %s23, 3
      %p151 = por %p149, %p150
      %p152 = scmp.ne.s32.totalorder %s141, %s142
      %p153 = scmp.eq.s32.totalorder %s23, 0
      %p154 = por %p152, %p153
      %p155 = scmp.ne.s32.totalorder %s141, %s142
      %p156 = scmp.eq.s32.totalorder %s24, 3
      %p157 = por %p155, %p156
      %p159 = scmp.ne.s32.totalorder %s142, %s158
      %p160 = scmp.eq.s32.totalorder %s24, 0
      %p161 = por %p159, %p160
      %p162 = scmp.le.s32.totalorder 1, %s18
      %p163 = scmp.lt.s32.totalorder %s18, 5
      %p164 = pnand %p162, %p163
      %p165 = pneg %p164
      // Predicated region
      $region9: #{tpu_custom_call.1} parent=5 // pred_check
        _
      $region10: #{tpu_custom_call.1} parent=5 // pred_check_branch
        %167 = sbr.rel (%p164) target = $region12
      $region11: #{tpu_custom_call.1} parent=5 // pred_region
        %s168 = ssub.s32 %s18, 1
        // Predicated region
        $region13: #{tpu_custom_call.1} parent=11 // pred_check
          %p169 = pneg %p65
        $region14: #{tpu_custom_call.1} parent=11 // pred_check_branch
          %171 = sbr.rel (%p169) target = $region16
        $region15: #{tpu_custom_call.1} parent=11 // pred_region
          %173 = vsyncadd [#allocation6], 0
          %s174 = sshll.u32 %s1, 4
          %s175 = int_to_ptr.hbm [resolvable:$true] %s174
          %s176 = sshll.u32 [#allocation5], 4
          %s177 = int_to_ptr.vmem [resolvable:$true] %s176
          %182 = dma.hbm_to_vmem [thread:$0]  %s175, 512, %s177, [#allocation6], 128, 128, 8
        $region16: #{tpu_custom_call.1} parent=11 // pred_fallthru
          _
        // Predicated region
        $region17: #{tpu_custom_call.1} parent=11 // pred_check
          %p183 = pneg %p86
        $region18: #{tpu_custom_call.1} parent=11 // pred_check_branch
          %185 = sbr.rel (%p183) target = $region20
        $region19: #{tpu_custom_call.1} parent=11 // pred_region
          _
        $region20: #{tpu_custom_call.1} parent=11 // pred_fallthru
          _
        // Predicated region
        $region21: #{tpu_custom_call.1} parent=11 // pred_check
          %p186 = pneg %p107
        $region22: #{tpu_custom_call.1} parent=11 // pred_check_branch
          %188 = sbr.rel (%p186) target = $region24
        $region23: #{tpu_custom_call.1} parent=11 // pred_region
          %190 = vsyncadd [#allocation6], 0
          %s191 = sshll.u32 %s3, 4
          %s192 = int_to_ptr.hbm [resolvable:$true] %s191
          %s193 = sshll.u32 [#allocation7], 4
          %s194 = int_to_ptr.vmem [resolvable:$true] %s193
          %199 = dma.hbm_to_vmem [thread:$0]  %s192, 2048, %s194, [#allocation6], 128, 128, 8
        $region24: #{tpu_custom_call.1} parent=11 // pred_fallthru
          _
        // Predicated region
        $region25: #{tpu_custom_call.1} parent=11 // pred_check
          %p200 = pneg %p128
        $region26: #{tpu_custom_call.1} parent=11 // pred_check_branch
          %202 = sbr.rel (%p200) target = $region28
        $region27: #{tpu_custom_call.1} parent=11 // pred_region
          _
        $region28: #{tpu_custom_call.1} parent=11 // pred_fallthru
          _
      $region12: #{tpu_custom_call.1} parent=5 // pred_fallthru
        _
      %p203 = scmp.lt.s32.totalorder %s18, 4
      // Predicated region
      $region29: #{tpu_custom_call.1} parent=5 // pred_check
        %p204 = pneg %p203
      $region30: #{tpu_custom_call.1} parent=5 // pred_check_branch
        %206 = sbr.rel (%p204) target = $region32
      $region31: #{tpu_custom_call.1} parent=5 // pred_region
        // Predicated region
        $region33: #{tpu_custom_call.1} parent=31 // pred_check
          %p207 = pneg %p38
        $region34: #{tpu_custom_call.1} parent=31 // pred_check_branch
          %209 = sbr.rel (%p207) target = $region36
        $region35: #{tpu_custom_call.1} parent=31 // pred_region
          %s210 = sand.u32 %s28, 1
          %s211 = scalar_lea.sflag [#allocation3], %s210
          %s212 = sand.u32 %s28, 1
          %s213 = smul.addr %s212, 8
          %s214 = scalar_lea.vmem [#allocation2], %s213
          %216 = vsyncadd %s211, 0
          %s217 = smul.addr %s18, 8
          %s218 = scalar_lea.hbm %s0, %s217
          %s220 = sshll.u32 %s218, 4
          %s221 = int_to_ptr.hbm [resolvable:$true] %s220
          %s222 = sshll.u32 %s214, 4
          %s223 = int_to_ptr.vmem [resolvable:$true] %s222
          %225 = dma.hbm_to_vmem [thread:$0]  %s221, 128, %s223, %s211
        $region36: #{tpu_custom_call.1} parent=31 // pred_fallthru
          _
      $region32: #{tpu_custom_call.1} parent=5 // pred_fallthru
        _
      %p226 = scmp.le.s32.totalorder 1, %s18
      %p227 = scmp.lt.s32.totalorder %s18, 5
      %p228 = pnand %p226, %p227
      %p229 = pneg %p228
      // Predicated region
      $region37: #{tpu_custom_call.1} parent=5 // pred_check
        _
      $region38: #{tpu_custom_call.1} parent=5 // pred_check_branch
        %231 = sbr.rel (%p228) target = $region40
      $region39: #{tpu_custom_call.1} parent=5 // pred_region
        %s232 = ssub.s32 %s18, 1
        %s233 = sand.u32 %s31, 1
        %s234 = scalar_lea.sflag [#allocation3], %s233
        %s235 = sand.u32 %s31, 1
        %s236 = smul.addr %s235, 8
        %s237 = scalar_lea.vmem [#allocation2], %s236
        // Predicated region
        $region41: #{tpu_custom_call.1} parent=39 // pred_check
          %p238 = pneg %p44
        $region42: #{tpu_custom_call.1} parent=39 // pred_check_branch
          %240 = sbr.rel (%p238) target = $region44
        $region43: #{tpu_custom_call.1} parent=39 // pred_region
          %242 = dma.done %s234, 128
        $region44: #{tpu_custom_call.1} parent=39 // pred_fallthru
          _
        // Predicated region
        $region45: #{tpu_custom_call.1} parent=39 // pred_check
          %p243 = pneg %p65
        $region46: #{tpu_custom_call.1} parent=39 // pred_check_branch
          %245 = sbr.rel (%p243) target = $region48
        $region47: #{tpu_custom_call.1} parent=39 // pred_region
          %247 = dma.done [#allocation6], 512
        $region48: #{tpu_custom_call.1} parent=39 // pred_fallthru
          _
        // Predicated region
        $region49: #{tpu_custom_call.1} parent=39 // pred_check
          %p248 = pneg %p107
        $region50: #{tpu_custom_call.1} parent=39 // pred_check_branch
          %250 = sbr.rel (%p248) target = $region52
        $region51: #{tpu_custom_call.1} parent=39 // pred_region
          %252 = dma.done [#allocation6], 2048
        $region52: #{tpu_custom_call.1} parent=39 // pred_fallthru
          _
        %s253 = sand.u32 %s31, 1
        %s254 = scalar_lea.sflag [#allocation3], %s253
        %s255 = sand.u32 %s31, 1
        %s256 = smul.addr %s255, 8
        %s257 = scalar_lea.vmem [#allocation2], %s256
        %p258 = pneg %p44
        %p259 = pneg %p41
        %p260 = pneg %p65
        %p261 = pneg %p62
        %p262 = pneg %p86
        %p263 = pneg %p83
        %p264 = pneg %p107
        %p265 = pneg %p104
        %p266 = pneg %p128
        %p267 = pneg %p125
        %p268 = pneg %p154
        %p269 = pneg %p151
        %s270 = sand.u32 %s141, 1
        %s271 = scalar_lea.sflag [#allocation4], %s270
        %s272 = sand.u32 %s141, 1
        %s273 = smul.addr %s272, 8
        %s274 = scalar_lea.vmem [#allocation8], %s273
        %v275 = vld [vmem:[%s237] sm:$0xff]
        %v276 = vld [vmem:[#allocation5] sm:$0xff]
        %v277 = vld [vmem:[#allocation5 + $0x8] sm:$0xff]
        %v278 = vld [vmem:[#allocation5 + $0x10] sm:$0xff]
        %v279 = vld [vmem:[#allocation5 + $0x18] sm:$0xff]
        %v280 = vld [vmem:[%s2] sm:$0x1]
        %v282 = vperm.slane %v280, 0
        %vm284 = vcmask 261120
        %v286 = vsel %vm284, %v275, 0
        %288 = vmatpush.msra.mxu0 0.0
        %289 = vmatpush.msra.mxu0 0.0
        %290 = vmatpush.msra.mxu0 0.0
        %291 = vmatpush.msra.mxu0 0.0
        %292 = vmatpush.msra.mxu0 0.0
        %293 = vmatpush.msra.mxu0 0.0
        %294 = vmatpush.msra.mxu0 0.0
        %295 = vmatpush.msra.mxu0 0.0
        %296 = vmatpush.msra.mxu0 0.0
        %297 = vmatpush.msra.mxu0 0.0
        %298 = vmatpush.msra.mxu0 0.0
        %299 = vmatpush.msra.mxu0 0.0
        %300 = vmatpush.msra.mxu0 %v279
        %301 = vmatpush.msra.mxu0 %v278
        %302 = vmatpush.msra.mxu0 %v277
        %303 = vmatpush.msra.mxu0 %v276
        %304 = vmatmul.f32.gmra.mxu0 %v286
        %v305 = vpop.f32.mrf.mxu0
        %v306 = vadd.f32 %v282, %v305
        %307 = vdwg.mxu0
        %v308 = vld [vmem:[#allocation7] sm:$0xff]
        %v309 = vld [vmem:[#allocation7 + $0x8] sm:$0xff]
        %v310 = vld [vmem:[#allocation7 + $0x10] sm:$0xff]
        %v311 = vld [vmem:[#allocation7 + $0x18] sm:$0xff]
        %v312 = vld [vmem:[#allocation7 + $0x20] sm:$0xff]
        %v313 = vld [vmem:[#allocation7 + $0x28] sm:$0xff]
        %v314 = vld [vmem:[#allocation7 + $0x30] sm:$0xff]
        %v315 = vld [vmem:[#allocation7 + $0x38] sm:$0xff]
        %v316 = vld [vmem:[#allocation7 + $0x40] sm:$0xff]
        %v317 = vld [vmem:[#allocation7 + $0x48] sm:$0xff]
        %v318 = vld [vmem:[#allocation7 + $0x50] sm:$0xff]
        %v319 = vld [vmem:[#allocation7 + $0x58] sm:$0xff]
        %v320 = vld [vmem:[#allocation7 + $0x60] sm:$0xff]
        %v321 = vld [vmem:[#allocation7 + $0x68] sm:$0xff]
        %v322 = vld [vmem:[#allocation7 + $0x70] sm:$0xff]
        %v323 = vld [vmem:[#allocation7 + $0x78] sm:$0xff]
        %v324 = vld [vmem:[%s4] sm:$0x1]
        %v326 = vperm.slane %v324, 0
        %328 = vmatpush.msra.mxu0 %v323
        %329 = vmatpush.msra.mxu0 %v322
        %330 = vmatpush.msra.mxu0 %v321
        %331 = vmatpush.msra.mxu0 %v320
        %332 = vmatpush.msra.mxu0 %v319
        %333 = vmatpush.msra.mxu0 %v318
        %334 = vmatpush.msra.mxu0 %v317
        %335 = vmatpush.msra.mxu0 %v316
        %336 = vmatpush.msra.mxu0 %v315
        %337 = vmatpush.msra.mxu0 %v314
        %338 = vmatpush.msra.mxu0 %v313
        %339 = vmatpush.msra.mxu0 %v312
        %340 = vmatpush.msra.mxu0 %v311
        %341 = vmatpush.msra.mxu0 %v310
        %342 = vmatpush.msra.mxu0 %v309
        %343 = vmatpush.msra.mxu0 %v308
        %344 = vmatmul.f32.gmra.mxu0 %v306
        %v345 = vpop.f32.mrf.mxu0
        %v346 = vadd.f32 %v326, %v345
        %347 = vdwg.mxu0
        %348 = vst [vmem:[%s274] sm:$0xff] %v346
        %s349 = sand.u32 %s141, 1
        %s350 = scalar_lea.sflag [#allocation4], %s349
        %s351 = sand.u32 %s141, 1
        %s352 = smul.addr %s351, 8
        %s353 = scalar_lea.vmem [#allocation8], %s352
        // Predicated region
        $region53: #{tpu_custom_call.1} parent=39 // pred_check
          %p354 = pneg %p151
        $region54: #{tpu_custom_call.1} parent=39 // pred_check_branch
          %356 = sbr.rel (%p354) target = $region56
        $region55: #{tpu_custom_call.1} parent=39 // pred_region
          %358 = vsyncadd %s350, 0
          %s359 = smul.addr %s23, 8
          %s360 = scalar_lea.hbm %s5, %s359
          %s362 = sshll.u32 %s353, 4
          %s363 = int_to_ptr.vmem [resolvable:$true] %s362
          %s364 = sshll.u32 %s360, 4
          %s365 = int_to_ptr.hbm [resolvable:$true] %s364
          %367 = dma.vmem_to_hbm [thread:$0]  %s363, 128, %s365, %s350
        $region56: #{tpu_custom_call.1} parent=39 // pred_fallthru
          _
      $region40: #{tpu_custom_call.1} parent=5 // pred_fallthru
        _
      %p368 = scmp.le.s32.totalorder 2, %s18
      // Predicated region
      $region57: #{tpu_custom_call.1} parent=5 // pred_check
        %p369 = pneg %p368
      $region58: #{tpu_custom_call.1} parent=5 // pred_check_branch
        %371 = sbr.rel (%p369) target = $region60
      $region59: #{tpu_custom_call.1} parent=5 // pred_region
        %s372 = ssub.s32 %s18, 2
        // Predicated region
        $region61: #{tpu_custom_call.1} parent=59 // pred_check
          %p373 = pneg %p157
        $region62: #{tpu_custom_call.1} parent=59 // pred_check_branch
          %375 = sbr.rel (%p373) target = $region64
        $region63: #{tpu_custom_call.1} parent=59 // pred_region
          %s376 = sand.u32 %s142, 1
          %s377 = scalar_lea.sflag [#allocation4], %s376
          %s378 = sand.u32 %s142, 1
          %s379 = smul.addr %s378, 8
          %s380 = scalar_lea.vmem [#allocation8], %s379
          %382 = dma.done %s377, 128
        $region64: #{tpu_custom_call.1} parent=59 // pred_fallthru
          _
      $region60: #{tpu_custom_call.1} parent=5 // pred_fallthru
        _
    $region6: #{tpu_custom_call.1} parent=1 // loop_footer
      %s22 = sadd.s32 1, %s18
    $region7: #{tpu_custom_call.1} parent=1 // loop_footer_branch
      %17 = sbr.rel target = $region3
    $region8: #{tpu_custom_call.1} parent=1 // loop_exit
      _
    %383 = vsyncpa [#allocation3], 1
    %s384 = scalar_lea.sflag [#allocation3], 1
    %385 = vsyncpa %s384, 1
    %386 = vsyncpa [#allocation6], 1
    %387 = vsyncpa [#allocation4], 1
    %s388 = scalar_lea.sflag [#allocation4], 1
    %389 = vsyncpa %s388, 1

</llo_original>
